<compile_context>
chip_gen: v5e
topology: v5e:2x2
jax: 0.10.0
libtpu: 0.0.40
codegen_flags: <defaults>
</compile_context>

<pallas_src>
import jax
import jax.numpy as jnp
from jax.experimental import pallas as pl
from jax.experimental.pallas import tpu as pltpu


def _copy_kernel(x_ref, o_ref):
    # Pure identity copy of a lane-dense tile.
    o_ref[...] = x_ref[...]


def _sublane_multiple(dtype) -> int:
    # Sub-32-bit dtypes pack along sublanes: 8 rows (f32), 16 (bf16), 32 (i8).
    itemsize = jnp.dtype(dtype).itemsize
    return max(8, 32 // max(1, itemsize))


def _choose_slab(total: int, n: int, flat: int):
    """Pick a (rows, lanes) 2-D view of `total` elements that is lane-dense.

    Prefers a large multiple-of-128 lane width with rows >= 8; falls back to
    the logical (n, flat) view if `total` has no multiple-of-128 divisor.
    """
    lanes = None
    for cand in (32768, 16384, 8192, 4096, 2048, 1024, 512, 256, 128):
        if total % cand == 0:
            if lanes is None:
                lanes = cand            # largest dividing candidate so far
            if total // cand >= 8:      # prefer rows >= 8 (full sublanes)
                lanes = cand
                break
    if lanes is None:
        return n, flat                  # last dim == full logical dim (legal)
    return total // lanes, lanes


def _choose_block(rows: int, lanes: int, itemsize: int, sub: int,
                  max_block_bytes: int):
    """Block shape: multiples of (sub, 128) or full-extent, within byte budget."""
    # Lane axis: full extent if a sub-row strip fits, otherwise tile at x128.
    if sub * lanes * itemsize <= max_block_bytes or lanes <= 128:
        block_lanes = lanes
    else:
        block_lanes = max(128, (max_block_bytes // (sub * itemsize)) // 128 * 128)
        block_lanes = min(block_lanes, lanes)

    # Row axis: as many sublane-multiples as fit in the budget.
    row_bytes = max(1, block_lanes * itemsize)
    block_rows = max(sub, (max_block_bytes // row_bytes) // sub * sub)
    block_rows = min(block_rows, rows)
    if block_rows < rows:
        block_rows = max(sub, (block_rows // sub) * sub)
    return block_rows, block_lanes


def lambda_flatten(x):
    """Recommended path: Lambda(lambda x: x.view(x.size(0), -1)).

    Metadata-only reshape — zero HBM traffic, zero launch overhead. The copy
    (if one is ever needed) should be fused into the consuming matmul kernel.
    """
    n = x.shape[0]
    return jnp.reshape(x, (n, -1))


def lambda_flatten_pallas(x, *, max_block_bytes=4 * 1024 * 1024):
    """Explicit Pallas identity-copy version of the flatten (materializing)."""
    n = x.shape[0]
    flat = 1
    for d in x.shape[1:]:
        flat *= d
    total = n * flat
    itemsize = jnp.dtype(x.dtype).itemsize
    sub = _sublane_multiple(x.dtype)

    # 2-D view chosen purely for layout (reshapes are free in the wrapper).
    rows, lanes = _choose_slab(total, n, flat)
    x2d = jnp.reshape(x, (rows, lanes))

    block_rows, block_lanes = _choose_block(rows, lanes, itemsize, sub,
                                            max_block_bytes)
    grid = (pl.cdiv(rows, block_rows), pl.cdiv(lanes, block_lanes))

    out2d = pl.pallas_call(
        _copy_kernel,
        out_shape=jax.ShapeDtypeStruct((rows, lanes), x.dtype),
        grid=grid,
        in_specs=[pl.BlockSpec((block_rows, block_lanes), lambda i, j: (i, j))],
        out_specs=pl.BlockSpec((block_rows, block_lanes), lambda i, j: (i, j)),
        input_output_aliases={0: 0},
        cost_estimate=pl.CostEstimate(
            flops=0,
            transcendentals=0,
            bytes_accessed=2 * total * itemsize,
        ),
        compiler_params=pltpu.CompilerParams(
            dimension_semantics=("parallel", "parallel"),
            # 4 MiB blocks, double-buffered in+out -> <= 16 MiB; safe under
            # v5e's 16 MiB default once raised, and under v6e/v7x scoped VMEM.
            vmem_limit_bytes=32 << 20,
        ),
    )(x2d)

    # Free metadata reshape back to the logical (N, flat) output.
    return jnp.reshape(out2d, (n, flat))


if __name__ == "__main__":
    key = jax.random.PRNGKey(0)
    # Small shapes consistent with an FC100-style conv feature map.
    N, C, H, W = 2, 4, 16, 16
    x = jax.random.normal(key, (N, C, H, W), dtype=jnp.float32)

    ref = x.reshape(N, -1)

    # Recommended (metadata-only) path.
    out_fast = jax.block_until_ready(lambda_flatten(x))
    assert out_fast.shape == (N, C * H * W)
    assert jnp.array_equal(out_fast, ref), "reshape flatten mismatch"

    # Explicit Pallas copy-kernel path.
    out_pallas = jax.block_until_ready(lambda_flatten_pallas(x))
    assert out_pallas.shape == (N, C * H * W)
    assert jnp.array_equal(out_pallas, ref), "Pallas flatten mismatch"

    print("KERNEL_OK")
</pallas_src>

<mosaic_0001>
module attributes {stable_mosaic.version = 11 : i64} {
  func.func @_copy_kernel(%arg0: i32, %arg1: i32, %arg2: memref<8x256xf32, #tpu.memory_space<vmem>>, %arg3: memref<8x256xf32, #tpu.memory_space<vmem>>) attributes {dimension_semantics = [#tpu.dimension_semantics<parallel>, #tpu.dimension_semantics<parallel>], iteration_bounds = array<i64: 1, 1>, scalar_prefetch = 0 : i64, scratch_operands = 0 : i64, tpu.core_type = #tpu.core_type<tc>, window_params = [{transform_indices = @transform_0, window_bounds = array<i64: 8, 256>}, {transform_indices = @transform_1, window_bounds = array<i64: 8, 256>}]} {
    %c0 = arith.constant 0 : index
    %c0_0 = arith.constant 0 : index
    %0 = vector.load %arg2[%c0, %c0_0] : memref<8x256xf32, #tpu.memory_space<vmem>>, vector<8x256xf32>
    %c0_1 = arith.constant 0 : index
    %c0_2 = arith.constant 0 : index
    %1 = vector.load %arg3[%c0_1, %c0_2] : memref<8x256xf32, #tpu.memory_space<vmem>>, vector<8x256xf32>
    tpu.vector_store %arg3[%c0_1, %c0_2], %0 {strides = array<i32>} : memref<8x256xf32, #tpu.memory_space<vmem>>, vector<8x256xf32>,
    return
  }
  func.func @transform_0(%arg0: i32, %arg1: i32) -> (i32, i32) {
    %c0_i32 = arith.constant 0 : i32
    return %arg0, %arg1 : i32, i32
  }
  func.func @transform_1(%arg0: i32, %arg1: i32) -> (i32, i32) {
    %c0_i32 = arith.constant 0 : i32
    return %arg0, %arg1 : i32, i32
  }
}

</mosaic_0001>

<llo_original>
// kernel: tpu_custom_call.1
$region0: #{tpu_custom_call.1}
  #allocation0 [shape = 'u32[]', space=smem, size = 0x4, offset = 0x4, fixed_abs, tag = 'smem constant byte address 0x4 - core index']
  #allocation1 [shape = 'u32[72,128]{1,0:T(1,128)}', space=vmem, size = 0x9000, scoped, tag = 'internal scratch']
  %s0 = inlined_call_operand.hbm [shape: f32[8,256], index: 0, kind: input, shape index: {}, may-alias: {0,1}]
  %s1 = inlined_call_operand.hbm [shape: f32[8,256], index: 1, kind: output, shape index: {}, may-alias: {0,1}]
  %s2 = sld [smem:[#allocation0]]
  $region18: #{tpu_custom_call.1} parent=0
    _
  %s4 = ssub.s32 1, %s2
  %s5 = scalar_select 0, %s4, %s2
  $region1: #{tpu_custom_call.1} parent=0
    #allocation2 [shape = 'u8[8192]{0}', space=vmem, size = 0x2000, scoped, tag = 'input window, operand 0, single buffered']
    #allocation3 [shape = 's32[1]{0}', space=sflag, size = 0x4, scoped, tag = 'scoped memory for tpu_custom_call.1']
    #allocation4 [shape = 's32[1]{0}', space=sflag, size = 0x4, scoped, tag = 'scoped memory for tpu_custom_call.1']
    #allocation5 [shape = 'u8[8192]{0}', space=vmem, size = 0x2000, scoped, tag = 'output window, operand 0, single buffered']
    %6 = vsyncpa [#allocation3], 0
    %7 = vsyncpa [#allocation4], 0
    // Predicated region
    $region2: #{tpu_custom_call.1} parent=1 // pred_check
      _
    $region3: #{tpu_custom_call.1} parent=1 // pred_check_branch
      %9 = sbr.rel (0) target = $region5
    $region4: #{tpu_custom_call.1} parent=1 // pred_region
      %11 = vsyncadd [#allocation3], 0
      %s13 = sshll.u32 %s0, 4
      %s14 = int_to_ptr.hbm [resolvable:$true] %s13
      %s15 = sshll.u32 [#allocation2], 4
      %s16 = int_to_ptr.vmem [resolvable:$true] %s15
      %18 = dma.hbm_to_vmem [thread:$0]  %s14, 256, %s16, [#allocation3]
    $region5: #{tpu_custom_call.1} parent=1 // pred_fallthru
      _
    // Predicated region
    $region6: #{tpu_custom_call.1} parent=1 // pred_check
      _
    $region7: #{tpu_custom_call.1} parent=1 // pred_check_branch
      %20 = sbr.rel (0) target = $region9
    $region8: #{tpu_custom_call.1} parent=1 // pred_region
      %22 = dma.done [#allocation3], 256
    $region9: #{tpu_custom_call.1} parent=1 // pred_fallthru
      _
    %v23 = vld [vmem:[#allocation2] sm:$0xff]
    %v24 = vld [vmem:[#allocation2 + $0x8] sm:$0xff]
    %25 = vst [vmem:[#allocation5] sm:$0xff] %v23
    %26 = vst [vmem:[#allocation5 + $0x8] sm:$0xff] %v24
    // Predicated region
    $region10: #{tpu_custom_call.1} parent=1 // pred_check
      _
    $region11: #{tpu_custom_call.1} parent=1 // pred_check_branch
      %28 = sbr.rel (0) target = $region13
    $region12: #{tpu_custom_call.1} parent=1 // pred_region
      %30 = vsyncadd [#allocation4], 0
      %s32 = sshll.u32 [#allocation5], 4
      %s33 = int_to_ptr.vmem [resolvable:$true] %s32
      %s34 = sshll.u32 %s1, 4
      %s35 = int_to_ptr.hbm [resolvable:$true] %s34
      %37 = dma.vmem_to_hbm [thread:$0]  %s33, 256, %s35, [#allocation4]
    $region13: #{tpu_custom_call.1} parent=1 // pred_fallthru
      _
    // Predicated region
    $region14: #{tpu_custom_call.1} parent=1 // pred_check
      _
    $region15: #{tpu_custom_call.1} parent=1 // pred_check_branch
      %39 = sbr.rel (0) target = $region17
    $region16: #{tpu_custom_call.1} parent=1 // pred_region
      %41 = dma.done [#allocation4], 256
    $region17: #{tpu_custom_call.1} parent=1 // pred_fallthru
      _
    %42 = vsyncpa [#allocation3], 1
    %43 = vsyncpa [#allocation4], 1

</llo_original>
